<compile_context>
chip_gen: v5e
topology: v5e:2x2
jax: 0.10.0
libtpu: 0.0.40
codegen_flags: <defaults>
</compile_context>

<pallas_src>
import functools

import jax
import jax.numpy as jnp
from jax.experimental import pallas as pl
from jax.experimental.pallas import tpu as pltpu


def _round_up(x, m):
    return ((x + m - 1) // m) * m


# ---------------------------------------------------------------------------
# Kernels
# ---------------------------------------------------------------------------
def _agg_kernel(a_ref, f_ref, b_ref, o_ref, acc_ref, *, f_resident, tk):
    """out = relu( (sum_k A_tile @ F_tile) + b ), F = X @ W already projected."""
    k = pl.program_id(2)

    @pl.when(k == 0)
    def _():
        acc_ref[...] = jnp.zeros_like(acc_ref)

    a = a_ref[0].astype(jnp.bfloat16)            # A may arrive as f32: cast in-kernel
    if f_resident:
        start = pl.multiple_of(k * tk, tk)
        f = f_ref[0, pl.ds(start, tk), :]
    else:
        f = f_ref[0]
    acc_ref[...] += jnp.dot(a, f, preferred_element_type=jnp.float32)

    @pl.when(k == pl.num_programs(2) - 1)
    def _():
        y = acc_ref[...] + b_ref[...]
        o_ref[0] = jnp.maximum(y, 0.0).astype(o_ref.dtype)


def _agg_proj_kernel(a_ref, x_ref, w_ref, b_ref, o_ref, acc_ref, *, f_resident, tk):
    """out = relu( (sum_k A_tile @ X_tile) @ W + b )."""
    k = pl.program_id(2)

    @pl.when(k == 0)
    def _():
        acc_ref[...] = jnp.zeros_like(acc_ref)

    a = a_ref[0].astype(jnp.bfloat16)
    if f_resident:
        start = pl.multiple_of(k * tk, tk)
        x = x_ref[0, pl.ds(start, tk), :]
    else:
        x = x_ref[0]
    acc_ref[...] += jnp.dot(a, x, preferred_element_type=jnp.float32)

    @pl.when(k == pl.num_programs(2) - 1)
    def _():
        y = jnp.dot(acc_ref[...].astype(w_ref.dtype), w_ref[...],
                    preferred_element_type=jnp.float32)
        y = y + b_ref[...]
        o_ref[0] = jnp.maximum(y, 0.0).astype(o_ref.dtype)


# ---------------------------------------------------------------------------
# Wrapper
# ---------------------------------------------------------------------------
def gcn_forward(A, X, W, b, out_dtype=None):
    """A: (B,N,N), X: (B,N,in_dim), W: (out_dim,in_dim) torch layout, b: (out_dim,)."""
    B, N, _ = A.shape
    in_dim = X.shape[-1]
    out_dim = W.shape[0]
    assert W.shape == (out_dim, in_dim)
    if out_dtype is None:
        out_dtype = X.dtype

    in_pad = _round_up(in_dim, 128)
    out_pad = _round_up(out_dim, 128)
    N_pad = _round_up(N, 128)

    # If the projected width is narrower, project once up-front and only
    # aggregate in the Pallas kernel (no per-row-tile X@W recompute).
    project_first = out_pad < in_pad
    feat_pad = out_pad if project_first else in_pad   # streamed-feature / acc width

    # ---- A: skip wrapper pad+cast whenever possible (A dominates HBM traffic)
    if N == N_pad:
        A_k = A                                       # stream as-is, cast in-kernel
    else:
        A_k = jnp.zeros((B, N_pad, N_pad), jnp.bfloat16)
        A_k = A_k.at[:, :N, :N].set(A.astype(jnp.bfloat16))
    a_item = jnp.dtype(A_k.dtype).itemsize
    out_item = jnp.dtype(out_dtype).itemsize

    # ---- X / W / b: small vs A; zero padding keeps math exact.
    X_p = jnp.zeros((B, N_pad, in_pad), jnp.bfloat16)
    X_p = X_p.at[:, :N, :in_dim].set(X.astype(jnp.bfloat16))
    W_p = jnp.zeros((in_pad, out_pad), jnp.bfloat16)
    W_p = W_p.at[:in_dim, :out_dim].set(W.T.astype(jnp.bfloat16))
    b_p = jnp.zeros((1, out_pad), jnp.float32)
    b_p = b_p.at[0, :out_dim].set(b.astype(jnp.float32))

    if project_first:
        # One-time projection (plain XLA GEMM on the MXU); padded rows stay zero.
        F = jnp.einsum("bnd,do->bno", X_p, W_p,
                       preferred_element_type=jnp.float32).astype(jnp.bfloat16)
    else:
        F = X_p

    # ---- VMEM budget (generation-aware) and tile selection ----------------
    try:
        vmem_cap = int(pltpu.get_tpu_info().vmem_capacity_bytes)
    except Exception:
        vmem_cap = 64 * 1024 * 1024                  # conservative (v7x per-core)
    vmem_limit = min(vmem_cap - 16 * 1024 * 1024, 100 * 1024 * 1024)
    budget = vmem_limit - 4 * 1024 * 1024

    # Keep the whole per-batch feature matrix resident in VMEM when small.
    f_resident = (N_pad * feat_pad * 2) <= 8 * 1024 * 1024

    def vmem_bytes(tm, tk, resident):
        a_b = 2 * tm * tk * a_item                        # double-buffered A tiles
        f_b = 2 * (N_pad if resident else tk) * feat_pad * 2
        w_b = 0 if project_first else 2 * in_pad * out_pad * 2
        o_b = 2 * tm * out_pad * out_item
        acc_b = tm * feat_pad * 4
        return a_b + f_b + w_b + o_b + acc_b + 2 * out_pad * 4

    TM = 128
    for cand in (1024, 512, 256, 128):
        if cand > N_pad or N_pad % cand != 0:
            continue
        if B == 1 and N_pad >= 256 and N_pad // cand < 2:
            continue                                      # >=2 row tiles for v7x's 2 TCs
        if vmem_bytes(cand, cand, f_resident) <= budget:
            TM = cand
            break
    TK = TM
    if vmem_bytes(TM, TK, f_resident) > budget:
        f_resident = False

    grid = (B, N_pad // TM, N_pad // TK)

    # ---- specs -------------------------------------------------------------
    a_spec = pl.BlockSpec((1, TM, TK), lambda bb, i, k: (bb, i, k))
    if f_resident:
        f_spec = pl.BlockSpec((1, N_pad, feat_pad), lambda bb, i, k: (bb, 0, 0))
    else:
        f_spec = pl.BlockSpec((1, TK, feat_pad), lambda bb, i, k: (bb, k, 0))
    b_spec = pl.BlockSpec((1, out_pad), lambda bb, i, k: (0, 0))
    o_spec = pl.BlockSpec((1, TM, out_pad), lambda bb, i, k: (bb, i, 0))

    if project_first:
        kernel = functools.partial(_agg_kernel, f_resident=f_resident, tk=TK)
        in_specs = [a_spec, f_spec, b_spec]
        inputs = (A_k, F, b_p)
        flops = 2 * B * N_pad * N_pad * out_pad
        w_bytes = 0
    else:
        kernel = functools.partial(_agg_proj_kernel, f_resident=f_resident, tk=TK)
        w_spec = pl.BlockSpec((in_pad, out_pad), lambda bb, i, k: (0, 0))
        in_specs = [a_spec, f_spec, w_spec, b_spec]
        inputs = (A_k, F, W_p, b_p)
        flops = 2 * B * N_pad * N_pad * in_pad + 2 * B * N_pad * in_pad * out_pad
        w_bytes = in_pad * out_pad * 2

    f_reads = 1 if f_resident else (N_pad // TM)
    bytes_accessed = (B * N_pad * N_pad * a_item
                      + f_reads * B * N_pad * feat_pad * 2
                      + w_bytes
                      + B * N_pad * out_pad * out_item)

    out_full = pl.pallas_call(
        kernel,
        out_shape=jax.ShapeDtypeStruct((B, N_pad, out_pad), out_dtype),
        grid_spec=pltpu.PrefetchScalarGridSpec(
            num_scalar_prefetch=0,
            grid=grid,
            in_specs=in_specs,
            out_specs=o_spec,
            scratch_shapes=[pltpu.VMEM((TM, feat_pad), jnp.float32)],
        ),
        compiler_params=pltpu.CompilerParams(
            dimension_semantics=("parallel", "parallel", "arbitrary"),
            vmem_limit_bytes=int(vmem_limit),
        ),
        cost_estimate=pl.CostEstimate(
            flops=int(flops),
            transcendentals=0,
            bytes_accessed=int(bytes_accessed),
        ),
    )(*inputs)

    return out_full[:, :N, :out_dim]


# ---------------------------------------------------------------------------
# Self-test
# ---------------------------------------------------------------------------
if __name__ == "__main__":
    key = jax.random.PRNGKey(0)

    def _ref(A, X, W, b):
        A16 = A.astype(jnp.bfloat16).astype(jnp.float32)
        X16 = X.astype(jnp.bfloat16).astype(jnp.float32)
        W16 = W.astype(jnp.bfloat16).astype(jnp.float32)
        return jnp.maximum(jnp.einsum("bij,bjd->bid", A16, X16) @ W16.T + b, 0.0)

    # --- case 1: in_dim <= out_dim -> fused aggregate-then-project kernel ---
    B, N, in_dim, out_dim = 2, 16, 32, 64
    k_a, k_x, k_w, k_b = jax.random.split(key, 4)
    A = jax.random.normal(k_a, (B, N, N), dtype=jnp.float32)
    X = jax.random.normal(k_x, (B, N, in_dim), dtype=jnp.float32)
    W = jax.random.normal(k_w, (out_dim, in_dim), dtype=jnp.float32) * 0.1
    bias = jax.random.normal(k_b, (out_dim,), dtype=jnp.float32) * 0.1

    out1 = jax.block_until_ready(gcn_forward(A, X, W, bias))
    ref1 = _ref(A, X, W, bias)
    assert out1.shape == (B, N, out_dim)
    assert jnp.allclose(out1, ref1, atol=5e-2, rtol=5e-2), (
        float(jnp.max(jnp.abs(out1 - ref1))))

    # --- case 2: in_dim > out_dim -> project-once + aggregation kernel ------
    B2, N2, in_dim2, out_dim2 = 2, 128, 160, 16
    k_a, k_x, k_w, k_b = jax.random.split(jax.random.PRNGKey(0), 4)
    A2 = jax.random.normal(k_a, (B2, N2, N2), dtype=jnp.float32)
    X2 = jax.random.normal(k_x, (B2, N2, in_dim2), dtype=jnp.float32)
    W2 = jax.random.normal(k_w, (out_dim2, in_dim2), dtype=jnp.float32) * 0.1
    bias2 = jax.random.normal(k_b, (out_dim2,), dtype=jnp.float32) * 0.1

    out2 = jax.block_until_ready(gcn_forward(A2, X2, W2, bias2))
    ref2 = _ref(A2, X2, W2, bias2)
    assert out2.shape == (B2, N2, out_dim2)
    assert jnp.allclose(out2, ref2, atol=1e-1, rtol=5e-2), (
        float(jnp.max(jnp.abs(out2 - ref2))))

    print("KERNEL_OK")
</pallas_src>

<mosaic_0001>
module attributes {stable_mosaic.version = 11 : i64} {
  func.func @_agg_proj_kernel(%arg0: i32, %arg1: i32, %arg2: i32, %arg3: memref<1x128x128xbf16, #tpu.memory_space<vmem>>, %arg4: memref<1x128x128xbf16, #tpu.memory_space<vmem>>, %arg5: memref<128x128xbf16, #tpu.memory_space<vmem>>, %arg6: memref<1x128xf32, #tpu.memory_space<vmem>>, %arg7: memref<1x128x128xf32, #tpu.memory_space<vmem>>, %arg8: memref<128x128xf32, #tpu.memory_space<vmem>>) attributes {dimension_semantics = [#tpu.dimension_semantics<parallel>, #tpu.dimension_semantics<parallel>, #tpu.dimension_semantics<arbitrary>], iteration_bounds = array<i64: 2, 1, 1>, scalar_prefetch = 0 : i64, scratch_operands = 1 : i64, tpu.core_type = #tpu.core_type<tc>, window_params = [{transform_indices = @transform_0, window_bounds = array<i64: 1, 128, 128>}, {transform_indices = @transform_1, window_bounds = array<i64: 1, 128, 128>}, {pipeline_mode = #tpu.pipeline_mode<synchronous>, transform_indices = @transform_2, window_bounds = array<i64: 128, 128>}, {pipeline_mode = #tpu.pipeline_mode<synchronous>, transform_indices = @transform_3, window_bounds = array<i64: 1, 128>}, {transform_indices = @transform_4, window_bounds = array<i64: 1, 128, 128>}]} {
    %c0_i32 = arith.constant 0 : i32
    %0 = arith.cmpi eq, %arg2, %c0_i32 : i32
    %1 = arith.extui %0 : i1 to i32
    %c0_i32_0 = arith.constant 0 : i32
    %2 = arith.cmpi ne, %1, %c0_i32_0 : i32
    scf.if %2 {
      %cst_11 = arith.constant 0.000000e+00 : f32
      %17 = vector.broadcast %cst_11 : f32 to vector<128x128xf32>
      %c0_12 = arith.constant 0 : index
      %c0_13 = arith.constant 0 : index
      %18 = vector.load %arg8[%c0_12, %c0_13] : memref<128x128xf32, #tpu.memory_space<vmem>>, vector<128x128xf32>
      tpu.vector_store %arg8[%c0_12, %c0_13], %17 {strides = array<i32>} : memref<128x128xf32, #tpu.memory_space<vmem>>, vector<128x128xf32>,
    } else {
    }
    %c0 = arith.constant 0 : index
    %c0_1 = arith.constant 0 : index
    %c0_2 = arith.constant 0 : index
    %3 = vector.load %arg3[%c0, %c0_1, %c0_2] : memref<1x128x128xbf16, #tpu.memory_space<vmem>>, vector<1x128x128xbf16>
    %4 = vector.shape_cast %3 : vector<1x128x128xbf16> to vector<128x128xbf16>
    %c128_i32 = arith.constant 128 : i32
    %5 = arith.muli %arg2, %c128_i32 : i32
    %6 = tpu.assume_multiple %5, 128 : i32
    %c0_3 = arith.constant 0 : index
    %7 = arith.index_cast %6 : i32 to index
    %c0_4 = arith.constant 0 : index
    %8 = vector.load %arg4[%c0_3, %7, %c0_4] : memref<1x128x128xbf16, #tpu.memory_space<vmem>>, vector<1x128x128xbf16>
    %9 = vector.shape_cast %8 : vector<1x128x128xbf16> to vector<128x128xbf16>
    %c0_5 = arith.constant 0 : index
    %c0_6 = arith.constant 0 : index
    %10 = vector.load %arg8[%c0_5, %c0_6] : memref<128x128xf32, #tpu.memory_space<vmem>>, vector<128x128xf32>
    %cst = arith.constant dense<0.000000e+00> : vector<128x128xf32>
    %11 = tpu.matmul %4, %9, %cst {dimension_numbers = #tpu.dot_dimension_numbers<[1], [0], [0], [1], [0, 0, 1, 1], [], []>} : vector<128x128xbf16>, vector<128x128xbf16>, vector<128x128xf32> -> vector<128x128xf32>
    %12 = arith.addf %10, %11 : vector<128x128xf32>
    %c0_7 = arith.constant 0 : index
    %c0_8 = arith.constant 0 : index
    %13 = vector.load %arg8[%c0_7, %c0_8] : memref<128x128xf32, #tpu.memory_space<vmem>>, vector<128x128xf32>
    tpu.vector_store %arg8[%c0_7, %c0_8], %12 {strides = array<i32>} : memref<128x128xf32, #tpu.memory_space<vmem>>, vector<128x128xf32>,
    %c0_i32_9 = arith.constant 0 : i32
    %14 = arith.cmpi eq, %arg2, %c0_i32_9 : i32
    %15 = arith.extui %14 : i1 to i32
    %c0_i32_10 = arith.constant 0 : i32
    %16 = arith.cmpi ne, %15, %c0_i32_10 : i32
    scf.if %16 {
      %c0_11 = arith.constant 0 : index
      %c0_12 = arith.constant 0 : index
      %17 = vector.load %arg8[%c0_11, %c0_12] : memref<128x128xf32, #tpu.memory_space<vmem>>, vector<128x128xf32>
      %18 = arith.truncf %17 : vector<128x128xf32> to vector<128x128xbf16>
      %c0_13 = arith.constant 0 : index
      %c0_14 = arith.constant 0 : index
      %19 = vector.load %arg5[%c0_13, %c0_14] : memref<128x128xbf16, #tpu.memory_space<vmem>>, vector<128x128xbf16>
      %cst_15 = arith.constant dense<0.000000e+00> : vector<128x128xf32>
      %20 = tpu.matmul %18, %19, %cst_15 {dimension_numbers = #tpu.dot_dimension_numbers<[1], [0], [0], [1], [0, 0, 1, 1], [], []>} : vector<128x128xbf16>, vector<128x128xbf16>, vector<128x128xf32> -> vector<128x128xf32>
      %c0_16 = arith.constant 0 : index
      %c0_17 = arith.constant 0 : index
      %21 = vector.load %arg6[%c0_16, %c0_17] : memref<1x128xf32, #tpu.memory_space<vmem>>, vector<1x128xf32>
      %22 = vector.broadcast %21 : vector<1x128xf32> to vector<128x128xf32>
      %23 = arith.addf %20, %22 : vector<128x128xf32>
      %cst_18 = arith.constant 0.000000e+00 : f32
      %24 = vector.broadcast %cst_18 : f32 to vector<128x128xf32>
      %25 = arith.maximumf %23, %24 : vector<128x128xf32>
      %c0_19 = arith.constant 0 : index
      %c0_20 = arith.constant 0 : index
      %c0_21 = arith.constant 0 : index
      %26 = vector.load %arg7[%c0_19, %c0_20, %c0_21] : memref<1x128x128xf32, #tpu.memory_space<vmem>>, vector<1x128x128xf32>
      %27 = vector.shape_cast %26 : vector<1x128x128xf32> to vector<128x128xf32>
      %28 = vector.shape_cast %25 : vector<128x128xf32> to vector<1x128x128xf32>
      tpu.vector_store %arg7[%c0_19, %c0_20, %c0_21], %28 {strides = array<i32>} : memref<1x128x128xf32, #tpu.memory_space<vmem>>, vector<1x128x128xf32>,
    } else {
    }
    return
  }
  func.func @transform_0(%arg0: i32, %arg1: i32, %arg2: i32) -> (i32, i32, i32) {
    %c0_i32 = arith.constant 0 : i32
    return %arg0, %arg1, %arg2 : i32, i32, i32
  }
  func.func @transform_1(%arg0: i32, %arg1: i32, %arg2: i32) -> (i32, i32, i32) {
    %c0_i32 = arith.constant 0 : i32
    %c0_i32_0 = arith.constant 0 : i32
    %c0_i32_1 = arith.constant 0 : i32
    return %arg0, %c0_i32, %c0_i32_0 : i32, i32, i32
  }
  func.func @transform_2(%arg0: i32, %arg1: i32, %arg2: i32) -> (i32, i32) {
    %c0_i32 = arith.constant 0 : i32
    %c0_i32_0 = arith.constant 0 : i32
    %c0_i32_1 = arith.constant 0 : i32
    return %c0_i32, %c0_i32_0 : i32, i32
  }
  func.func @transform_3(%arg0: i32, %arg1: i32, %arg2: i32) -> (i32, i32) {
    %c0_i32 = arith.constant 0 : i32
    %c0_i32_0 = arith.constant 0 : i32
    %c0_i32_1 = arith.constant 0 : i32
    return %c0_i32, %c0_i32_0 : i32, i32
  }
  func.func @transform_4(%arg0: i32, %arg1: i32, %arg2: i32) -> (i32, i32, i32) {
    %c0_i32 = arith.constant 0 : i32
    %c0_i32_0 = arith.constant 0 : i32
    return %arg0, %arg1, %c0_i32 : i32, i32, i32
  }
}

</mosaic_0001>

<llo_original>
// kernel: tpu_custom_call.1
$region0: #{tpu_custom_call.1}
  #allocation0 [shape = 'u32[]', space=smem, size = 0x4, offset = 0x4, fixed_abs, tag = 'smem constant byte address 0x4 - core index']
  #allocation1 [shape = 'u32[72,128]{1,0:T(1,128)}', space=vmem, size = 0x9000, scoped, tag = 'internal scratch']
  #allocation2 [shape = 'f32[128,128]{1,0:T(8,128)}', space=vmem, size = 0x10000, scoped, tag = 'scratch operand']
  %s0 = inlined_call_operand.hbm [shape: bf16[2,128,128], index: 0, kind: input, shape index: {}]
  %s1 = inlined_call_operand.hbm [shape: bf16[2,128,128], index: 1, kind: input, shape index: {}]
  %s2 = inlined_call_operand.hbm [shape: bf16[128,128], index: 2, kind: input, shape index: {}]
  %s3 = inlined_call_operand.vmem [shape: f32[1,128], index: 3, kind: input, shape index: {}]
  %s4 = inlined_call_operand.hbm [shape: f32[2,128,128], index: 4, kind: output, shape index: {}]
  %s5 = sld [smem:[#allocation0]]
  $region69: #{tpu_custom_call.1} parent=0
    _
  %s7 = ssub.s32 1, %s5
  %s8 = scalar_select 0, %s7, %s5
  $region1: #{tpu_custom_call.1} parent=0
    #allocation3 [shape = 'u8[65536]{0}', space=vmem, size = 0x10000, scoped, tag = 'input window, operand 0']
    #allocation4 [shape = 's32[2]{0}', space=sflag, size = 0x8, scoped, tag = 'scoped memory for tpu_custom_call.1']
    #allocation5 [shape = 's32[2]{0}', space=sflag, size = 0x8, scoped, tag = 'scoped memory for tpu_custom_call.1']
    #allocation6 [shape = 'u8[65536]{0}', space=vmem, size = 0x10000, scoped, tag = 'input window, operand 1']
    #allocation7 [shape = 's32[2]{0}', space=sflag, size = 0x8, scoped, tag = 'scoped memory for tpu_custom_call.1']
    #allocation8 [shape = 'u8[32768]{0}', space=vmem, size = 0x8000, scoped, tag = 'input window, operand 2, single buffered']
    #allocation9 [shape = 'u8[131072]{0}', space=vmem, size = 0x20000, scoped, tag = 'output window, operand 0']
    %9 = vsyncpa [#allocation4], 0
    %s10 = scalar_lea.sflag [#allocation4], 1
    %11 = vsyncpa %s10, 0
    %12 = vsyncpa [#allocation7], 0
    %s13 = scalar_lea.sflag [#allocation7], 1
    %14 = vsyncpa %s13, 0
    %15 = vsyncpa [#allocation5], 0
    %s16 = scalar_lea.sflag [#allocation5], 1
    %17 = vsyncpa %s16, 0
    loop: start=0, step=1, limit=4
    $region2: #{tpu_custom_call.1} parent=1 // loop_pre_header
      _
    $region3: #{tpu_custom_call.1} parent=1 // loop_header
      %s19 = sphi 0, %s23
      %p20 = scmp.ge.s32.totalorder %s19, 4
      %s26 = sphi 0, %s45
      %s27 = sphi 0, %s41
      %s28 = sphi 0, %s37
      %s29 = sphi 0, %s26
      %s30 = sphi 0, %s27
      %s31 = sphi 0, %s28
      %s32 = sphi 0, %s29
      %s33 = sphi 0, %s30
      %s34 = sphi 0, %s31
      %s52 = sphi 0, %s54
      %s55 = sphi 0, %s52
      %s56 = sphi 0, %s55
      %s72 = sphi 0, %s56
      %s78 = sphi 0, %s80
      %s81 = sphi 0, %s78
      %s82 = sphi 0, %s81
      %s98 = sphi 0, %s82
      %s102 = sphi 0, %s102
      %s104 = sphi 0, %s102
      %s105 = sphi 0, %s104
      %s119 = sphi 0, %s105
      %s123 = sphi 0, %s123
      %s125 = sphi 0, %s123
      %s126 = sphi 0, %s125
      %s140 = sphi 0, %s126
      %s148 = sphi 0, %s150
      %s151 = sphi 0, %s148
      %s152 = sphi 0, %s151
      %s168 = sphi 0, %s152
    $region4: #{tpu_custom_call.1} parent=1 // loop_header_branch
      %22 = sbr.rel (%p20) target = $region8
    $region5: #{tpu_custom_call.1} parent=1 // loop_body
      %s24 = ssub.s32 %s19, 1
      %s25 = ssub.s32 %s19, 2
      %s35 = sadd.s32 1, %s28
      %p36 = scmp.ge.s32.totalorder %s35, 1
      %s37 = scalar_select %p36, 0, %s35
      %s38 = sadd.s32 1, %s27
      %s39 = scalar_select %p36, %s38, %s27
      %p40 = scmp.ge.s32.totalorder %s39, 1
      %s41 = scalar_select %p40, 0, %s39
      %s42 = sadd.s32 1, %s26
      %s43 = scalar_select %p40, %s42, %s26
      %p44 = scmp.ge.s32.totalorder %s43, 2
      %s45 = scalar_select %p44, 0, %s43
      %s46 = ssub.s32 %s26, %s45
      %s47 = ssub.s32 %s27, %s41
      %s48 = sor.u32 %s46, %s47
      %s49 = ssub.s32 %s28, %s37
      %s50 = sor.u32 %s48, %s49
      %p51 = scmp.eq.s32.totalorder %s50, 0
      %s53 = sadd.s32 %s52, 1
      %s54 = scalar_select %p51, %s52, %s53
      %p57 = pneg %p51
      %p58 = scmp.eq.s32.totalorder %s19, 1
      %p59 = por %p57, %p58
      %p60 = scmp.ne.s32.totalorder %s52, %s55
      %p61 = scmp.eq.s32.totalorder %s19, 0
      %p62 = por %p60, %p61
      %p63 = scmp.ne.s32.totalorder %s52, %s55
      %p64 = scmp.eq.s32.totalorder %s24, 1
      %p65 = por %p63, %p64
      %p66 = scmp.ne.s32.totalorder %s55, %s56
      %p67 = scmp.eq.s32.totalorder %s24, 0
      %p68 = por %p66, %p67
      %p69 = scmp.ne.s32.totalorder %s55, %s56
      %p70 = scmp.eq.s32.totalorder %s25, 1
      %p71 = por %p69, %p70
      %p73 = scmp.ne.s32.totalorder %s56, %s72
      %p74 = scmp.eq.s32.totalorder %s25, 0
      %p75 = por %p73, %p74
      %s76 = ssub.s32 %s26, %s45
      %p77 = scmp.eq.s32.totalorder %s76, 0
      %s79 = sadd.s32 %s78, 1
      %s80 = scalar_select %p77, %s78, %s79
      %p83 = pneg %p77
      %p84 = scmp.eq.s32.totalorder %s19, 1
      %p85 = por %p83, %p84
      %p86 = scmp.ne.s32.totalorder %s78, %s81
      %p87 = scmp.eq.s32.totalorder %s19, 0
      %p88 = por %p86, %p87
      %p89 = scmp.ne.s32.totalorder %s78, %s81
      %p90 = scmp.eq.s32.totalorder %s24, 1
      %p91 = por %p89, %p90
      %p92 = scmp.ne.s32.totalorder %s81, %s82
      %p93 = scmp.eq.s32.totalorder %s24, 0
      %p94 = por %p92, %p93
      %p95 = scmp.ne.s32.totalorder %s81, %s82
      %p96 = scmp.eq.s32.totalorder %s25, 1
      %p97 = por %p95, %p96
      %p99 = scmp.ne.s32.totalorder %s82, %s98
      %p100 = scmp.eq.s32.totalorder %s25, 0
      %p101 = por %p99, %p100
      %s103 = sadd.s32 %s102, 1
      %p106 = scmp.eq.s32.totalorder %s19, 1
      %p107 = scmp.ne.s32.totalorder %s102, %s104
      %p108 = scmp.eq.s32.totalorder %s19, 0
      %p109 = por %p107, %p108
      %p110 = scmp.ne.s32.totalorder %s102, %s104
      %p111 = scmp.eq.s32.totalorder %s24, 1
      %p112 = por %p110, %p111
      %p113 = scmp.ne.s32.totalorder %s104, %s105
      %p114 = scmp.eq.s32.totalorder %s24, 0
      %p115 = por %p113, %p114
      %p116 = scmp.ne.s32.totalorder %s104, %s105
      %p117 = scmp.eq.s32.totalorder %s25, 1
      %p118 = por %p116, %p117
      %p120 = scmp.ne.s32.totalorder %s105, %s119
      %p121 = scmp.eq.s32.totalorder %s25, 0
      %p122 = por %p120, %p121
      %s124 = sadd.s32 %s123, 1
      %p127 = scmp.eq.s32.totalorder %s19, 1
      %p128 = scmp.ne.s32.totalorder %s123, %s125
      %p129 = scmp.eq.s32.totalorder %s19, 0
      %p130 = por %p128, %p129
      %p131 = scmp.ne.s32.totalorder %s123, %s125
      %p132 = scmp.eq.s32.totalorder %s24, 1
      %p133 = por %p131, %p132
      %p134 = scmp.ne.s32.totalorder %s125, %s126
      %p135 = scmp.eq.s32.totalorder %s24, 0
      %p136 = por %p134, %p135
      %p137 = scmp.ne.s32.totalorder %s125, %s126
      %p138 = scmp.eq.s32.totalorder %s25, 1
      %p139 = por %p137, %p138
      %p141 = scmp.ne.s32.totalorder %s126, %s140
      %p142 = scmp.eq.s32.totalorder %s25, 0
      %p143 = por %p141, %p142
      %s144 = ssub.s32 %s26, %s45
      %s145 = ssub.s32 %s27, %s41
      %s146 = sor.u32 %s144, %s145
      %p147 = scmp.eq.s32.totalorder %s146, 0
      %s149 = sadd.s32 %s148, 1
      %s150 = scalar_select %p147, %s148, %s149
      %p153 = pneg %p147
      %p154 = scmp.eq.s32.totalorder %s19, 1
      %p155 = por %p153, %p154
      %p156 = scmp.ne.s32.totalorder %s148, %s151
      %p157 = scmp.eq.s32.totalorder %s19, 0
      %p158 = por %p156, %p157
      %p159 = scmp.ne.s32.totalorder %s148, %s151
      %p160 = scmp.eq.s32.totalorder %s24, 1
      %p161 = por %p159, %p160
      %p162 = scmp.ne.s32.totalorder %s151, %s152
      %p163 = scmp.eq.s32.totalorder %s24, 0
      %p164 = por %p162, %p163
      %p165 = scmp.ne.s32.totalorder %s151, %s152
      %p166 = scmp.eq.s32.totalorder %s25, 1
      %p167 = por %p165, %p166
      %p169 = scmp.ne.s32.totalorder %s152, %s168
      %p170 = scmp.eq.s32.totalorder %s25, 0
      %p171 = por %p169, %p170
      %p172 = scmp.le.s32.totalorder 1, %s19
      %p173 = scmp.lt.s32.totalorder %s19, 3
      %p174 = pnand %p172, %p173
      %p175 = pneg %p174
      // Predicated region
      $region9: #{tpu_custom_call.1} parent=5 // pred_check
        _
      $region10: #{tpu_custom_call.1} parent=5 // pred_check_branch
        %177 = sbr.rel (%p174) target = $region12
      $region11: #{tpu_custom_call.1} parent=5 // pred_region
        %s178 = ssub.s32 %s19, 1
        // Predicated region
        $region13: #{tpu_custom_call.1} parent=11 // pred_check
          %p179 = pneg %p115
        $region14: #{tpu_custom_call.1} parent=11 // pred_check_branch
          %181 = sbr.rel (%p179) target = $region16
        $region15: #{tpu_custom_call.1} parent=11 // pred_region
          %183 = vsyncadd [#allocation7], 0
          %s184 = sshll.u32 %s2, 4
          %s185 = int_to_ptr.hbm [resolvable:$true] %s184
          %s186 = sshll.u32 [#allocation8], 4
          %s187 = int_to_ptr.vmem [resolvable:$true] %s186
          %192 = dma.hbm_to_vmem [thread:$0]  %s185, 1024, %s187, [#allocation7], 64, 64, 4
        $region16: #{tpu_custom_call.1} parent=11 // pred_fallthru
          _
        // Predicated region
        $region17: #{tpu_custom_call.1} parent=11 // pred_check
          %p193 = pneg %p136
        $region18: #{tpu_custom_call.1} parent=11 // pred_check_branch
          %195 = sbr.rel (%p193) target = $region20
        $region19: #{tpu_custom_call.1} parent=11 // pred_region
          _
        $region20: #{tpu_custom_call.1} parent=11 // pred_fallthru
          _
      $region12: #{tpu_custom_call.1} parent=5 // pred_fallthru
        _
      %p196 = scmp.lt.s32.totalorder %s19, 2
      // Predicated region
      $region21: #{tpu_custom_call.1} parent=5 // pred_check
        %p197 = pneg %p196
      $region22: #{tpu_custom_call.1} parent=5 // pred_check_branch
        %199 = sbr.rel (%p197) target = $region24
      $region23: #{tpu_custom_call.1} parent=5 // pred_region
        // Predicated region
        $region25: #{tpu_custom_call.1} parent=23 // pred_check
          %p200 = pneg %p62
        $region26: #{tpu_custom_call.1} parent=23 // pred_check_branch
          %202 = sbr.rel (%p200) target = $region28
        $region27: #{tpu_custom_call.1} parent=23 // pred_region
          %s203 = sand.u32 %s52, 1
          %s204 = scalar_lea.sflag [#allocation4], %s203
          %s205 = sand.u32 %s52, 1
          %s206 = smul.addr %s205, 64
          %s207 = scalar_lea.vmem [#allocation3], %s206
          %s208 = smul.u32 16, %s27
          %210 = vsyncadd %s204, 0
          %s211 = sadd.s32 %s28, %s208
          %s212 = smul.addr %s26, 16
          %s213 = sadd.s32 %s211, %s212
          %s214 = smul.addr %s213, 4
          %s215 = scalar_lea.hbm %s0, %s214
          %s216 = sshll.u32 %s215, 4
          %s217 = int_to_ptr.hbm [resolvable:$true] %s216
          %s218 = sshll.u32 %s207, 4
          %s219 = int_to_ptr.vmem [resolvable:$true] %s218
          %224 = dma.hbm_to_vmem [thread:$0]  %s217, 1024, %s219, %s204, 64, 64, 4
        $region28: #{tpu_custom_call.1} parent=23 // pred_fallthru
          _
        // Predicated region
        $region29: #{tpu_custom_call.1} parent=23 // pred_check
          %p225 = pneg %p88
        $region30: #{tpu_custom_call.1} parent=23 // pred_check_branch
          %227 = sbr.rel (%p225) target = $region32
        $region31: #{tpu_custom_call.1} parent=23 // pred_region
          %s228 = sand.u32 %s19, 1
          %s229 = scalar_lea.sflag [#allocation7], %s228
          %s230 = sand.u32 %s78, 1
          %s231 = smul.addr %s230, 64
          %s232 = scalar_lea.vmem [#allocation6], %s231
          %234 = vsyncadd %s229, 0
          %s235 = smul.addr %s26, 16
          %s236 = smul.addr %s235, 4
          %s237 = scalar_lea.hbm %s1, %s236
          %s238 = sshll.u32 %s237, 4
          %s239 = int_to_ptr.hbm [resolvable:$true] %s238
          %s240 = sshll.u32 %s232, 4
          %s241 = int_to_ptr.vmem [resolvable:$true] %s240
          %246 = dma.hbm_to_vmem [thread:$0]  %s239, 1024, %s241, %s229, 64, 64, 4
        $region32: #{tpu_custom_call.1} parent=23 // pred_fallthru
          _
      $region24: #{tpu_custom_call.1} parent=5 // pred_fallthru
        _
      %p247 = scmp.le.s32.totalorder 1, %s19
      %p248 = scmp.lt.s32.totalorder %s19, 3
      %p249 = pnand %p247, %p248
      %p250 = pneg %p249
      // Predicated region
      $region33: #{tpu_custom_call.1} parent=5 // pred_check
        _
      $region34: #{tpu_custom_call.1} parent=5 // pred_check_branch
        %252 = sbr.rel (%p249) target = $region36
      $region35: #{tpu_custom_call.1} parent=5 // pred_region
        %s253 = ssub.s32 %s19, 1
        %s254 = sand.u32 %s55, 1
        %s255 = scalar_lea.sflag [#allocation4], %s254
        %s256 = sand.u32 %s55, 1
        %s257 = smul.addr %s256, 64
        %s258 = scalar_lea.vmem [#allocation3], %s257
        // Predicated region
        $region37: #{tpu_custom_call.1} parent=35 // pred_check
          %p259 = pneg %p68
        $region38: #{tpu_custom_call.1} parent=35 // pred_check_branch
          %261 = sbr.rel (%p259) target = $region40
        $region39: #{tpu_custom_call.1} parent=35 // pred_region
          %263 = dma.done %s255, 1024
        $region40: #{tpu_custom_call.1} parent=35 // pred_fallthru
          _
        %s264 = sand.u32 %s24, 1
        %s265 = scalar_lea.sflag [#allocation7], %s264
        %s266 = sand.u32 %s81, 1
        %s267 = smul.addr %s266, 64
        %s268 = scalar_lea.vmem [#allocation6], %s267
        // Predicated region
        $region41: #{tpu_custom_call.1} parent=35 // pred_check
          %p269 = pneg %p94
        $region42: #{tpu_custom_call.1} parent=35 // pred_check_branch
          %271 = sbr.rel (%p269) target = $region44
        $region43: #{tpu_custom_call.1} parent=35 // pred_region
          %273 = dma.done %s265, 1024
        $region44: #{tpu_custom_call.1} parent=35 // pred_fallthru
          _
        // Predicated region
        $region45: #{tpu_custom_call.1} parent=35 // pred_check
          %p274 = pneg %p115
        $region46: #{tpu_custom_call.1} parent=35 // pred_check_branch
          %276 = sbr.rel (%p274) target = $region48
        $region47: #{tpu_custom_call.1} parent=35 // pred_region
          %278 = dma.done [#allocation7], 1024
        $region48: #{tpu_custom_call.1} parent=35 // pred_fallthru
          _
        %s279 = sand.u32 %s55, 1
        %s280 = scalar_lea.sflag [#allocation4], %s279
        %s281 = sand.u32 %s55, 1
        %s282 = smul.addr %s281, 64
        %s283 = scalar_lea.vmem [#allocation3], %s282
        %p284 = pneg %p68
        %p285 = pneg %p65
        %s286 = sand.u32 %s24, 1
        %s287 = scalar_lea.sflag [#allocation7], %s286
        %s288 = sand.u32 %s81, 1
        %s289 = smul.addr %s288, 64
        %s290 = scalar_lea.vmem [#allocation6], %s289
        %p291 = pneg %p94
        %p292 = pneg %p91
        %p293 = pneg %p115
        %p294 = pneg %p112
        %p295 = pneg %p136
        %p296 = pneg %p133
        %p297 = pneg %p164
        %p298 = pneg %p161
        %s299 = sand.u32 %s151, 1
        %s300 = scalar_lea.sflag [#allocation5], %s299
        %s301 = sand.u32 %s151, 1
        %s302 = smul.addr %s301, 128
        %s303 = scalar_lea.vmem [#allocation9], %s302
        %s304 = smul.u32 16, %s30
        %s305 = smul.u32 16, %s30
        %p306 = scmp.eq.s32.totalorder %s31, 0
        // Predicated region
        $region49: #{tpu_custom_call.1} parent=35 // pred_check
          %p307 = pneg %p306
        $region50: #{tpu_custom_call.1} parent=35 // pred_check_branch
          %309 = sbr.rel (%p307) target = $region52
        $region51: #{tpu_custom_call.1} parent=35 // pred_region
          %310 = vst [vmem:[#allocation2] sm:$0xff] 0.0
          %311 = vst [vmem:[#allocation2 + $0x8] sm:$0xff] 0.0
          %312 = vst [vmem:[#allocation2 + $0x10] sm:$0xff] 0.0
          %313 = vst [vmem:[#allocation2 + $0x18] sm:$0xff] 0.0
          %314 = vst [vmem:[#allocation2 + $0x20] sm:$0xff] 0.0
          %315 = vst [vmem:[#allocation2 + $0x28] sm:$0xff] 0.0
          %316 = vst [vmem:[#allocation2 + $0x30] sm:$0xff] 0.0
          %317 = vst [vmem:[#allocation2 + $0x38] sm:$0xff] 0.0
          %318 = vst [vmem:[#allocation2 + $0x40] sm:$0xff] 0.0
          %319 = vst [vmem:[#allocation2 + $0x48] sm:$0xff] 0.0
          %320 = vst [vmem:[#allocation2 + $0x50] sm:$0xff] 0.0
          %321 = vst [vmem:[#allocation2 + $0x58] sm:$0xff] 0.0
          %322 = vst [vmem:[#allocation2 + $0x60] sm:$0xff] 0.0
          %323 = vst [vmem:[#allocation2 + $0x68] sm:$0xff] 0.0
          %324 = vst [vmem:[#allocation2 + $0x70] sm:$0xff] 0.0
          %325 = vst [vmem:[#allocation2 + $0x78] sm:$0xff] 0.0
        $region52: #{tpu_custom_call.1} parent=35 // pred_fallthru
          _
        %v326 = vld [vmem:[%s258] sm:$0xf]
        %v327 = vld [vmem:[%s258 + $0x4] sm:$0xf]
        %v328 = vld [vmem:[%s258 + $0x8] sm:$0xf]
        %v329 = vld [vmem:[%s258 + $0xc] sm:$0xf]
        %v330 = vld [vmem:[%s258 + $0x10] sm:$0xf]
        %v331 = vld [vmem:[%s258 + $0x14] sm:$0xf]
        %v332 = vld [vmem:[%s258 + $0x18] sm:$0xf]
        %v333 = vld [vmem:[%s258 + $0x1c] sm:$0xf]
        %v334 = vld [vmem:[%s258 + $0x20] sm:$0xf]
        %v335 = vld [vmem:[%s258 + $0x24] sm:$0xf]
        %v336 = vld [vmem:[%s258 + $0x28] sm:$0xf]
        %v337 = vld [vmem:[%s258 + $0x2c] sm:$0xf]
        %v338 = vld [vmem:[%s258 + $0x30] sm:$0xf]
        %v339 = vld [vmem:[%s258 + $0x34] sm:$0xf]
        %v340 = vld [vmem:[%s258 + $0x38] sm:$0xf]
        %v341 = vld [vmem:[%s258 + $0x3c] sm:$0xf]
        %s342 = smul.u32 %s31, 128
        %s343 = sshra.s32 %s342, 3
        %s344 = sand.u32 %s342, 7
        %s345 = smul.addr %s343, 4
        %s346 = scalar_lea.vmem %s268, %s345 [#allocation6]
        %v347 = vld [vmem:[%s346] sm:$0xf]
        %v348 = vld [vmem:[%s346 + $0x4] sm:$0xf]
        %v349 = vld [vmem:[%s346 + $0x8] sm:$0xf]
        %v350 = vld [vmem:[%s346 + $0xc] sm:$0xf]
        %v351 = vld [vmem:[%s346 + $0x10] sm:$0xf]
        %v352 = vld [vmem:[%s346 + $0x14] sm:$0xf]
        %v353 = vld [vmem:[%s346 + $0x18] sm:$0xf]
        %v354 = vld [vmem:[%s346 + $0x1c] sm:$0xf]
        %v355 = vld [vmem:[%s346 + $0x20] sm:$0xf]
        %v356 = vld [vmem:[%s346 + $0x24] sm:$0xf]
        %v357 = vld [vmem:[%s346 + $0x28] sm:$0xf]
        %v358 = vld [vmem:[%s346 + $0x2c] sm:$0xf]
        %v359 = vld [vmem:[%s346 + $0x30] sm:$0xf]
        %v360 = vld [vmem:[%s346 + $0x34] sm:$0xf]
        %v361 = vld [vmem:[%s346 + $0x38] sm:$0xf]
        %v362 = vld [vmem:[%s346 + $0x3c] sm:$0xf]
        %v363 = vld [vmem:[#allocation2] sm:$0xff]
        %v364 = vld [vmem:[#allocation2 + $0x8] sm:$0xff]
        %v365 = vld [vmem:[#allocation2 + $0x10] sm:$0xff]
        %v366 = vld [vmem:[#allocation2 + $0x18] sm:$0xff]
        %v367 = vld [vmem:[#allocation2 + $0x20] sm:$0xff]
        %v368 = vld [vmem:[#allocation2 + $0x28] sm:$0xff]
        %v369 = vld [vmem:[#allocation2 + $0x30] sm:$0xff]
        %v370 = vld [vmem:[#allocation2 + $0x38] sm:$0xff]
        %v371 = vld [vmem:[#allocation2 + $0x40] sm:$0xff]
        %v372 = vld [vmem:[#allocation2 + $0x48] sm:$0xff]
        %v373 = vld [vmem:[#allocation2 + $0x50] sm:$0xff]
        %v374 = vld [vmem:[#allocation2 + $0x58] sm:$0xff]
        %v375 = vld [vmem:[#allocation2 + $0x60] sm:$0xff]
        %v376 = vld [vmem:[#allocation2 + $0x68] sm:$0xff]
        %v377 = vld [vmem:[#allocation2 + $0x70] sm:$0xff]
        %v378 = vld [vmem:[#allocation2 + $0x78] sm:$0xff]
        %v395 = vunpack.c.l.b16 %v326
        %v396 = vunpack.c.l.b16 %v327
        %v397 = vunpack.c.l.b16 %v328
        %v398 = vunpack.c.l.b16 %v329
        %v399 = vunpack.c.l.b16 %v330
        %v400 = vunpack.c.l.b16 %v331
        %v401 = vunpack.c.l.b16 %v332
        %v402 = vunpack.c.l.b16 %v333
        %v403 = vunpack.c.l.b16 %v334
        %v404 = vunpack.c.l.b16 %v335
        %v405 = vunpack.c.l.b16 %v336
        %v406 = vunpack.c.l.b16 %v337
        %v407 = vunpack.c.l.b16 %v338
        %v408 = vunpack.c.l.b16 %v339
        %v409 = vunpack.c.l.b16 %v340
        %v410 = vunpack.c.l.b16 %v341
        %v411 = vpack.c.b16 %v396, %v395
        %v412 = vpack.c.b16 %v398, %v397
        %v413 = vpack.c.b16 %v400, %v399
        %v414 = vpack.c.b16 %v402, %v401
        %v415 = vpack.c.b16 %v404, %v403
        %v416 = vpack.c.b16 %v406, %v405
        %v417 = vpack.c.b16 %v408, %v407
        %v418 = vpack.c.b16 %v410, %v409
        %v443 = vunpack.c.l.b16 %v347
        %v444 = vunpack.c.l.b16 %v348
        %v445 = vunpack.c.l.b16 %v349
        %v446 = vunpack.c.l.b16 %v350
        %v447 = vunpack.c.l.b16 %v351
        %v448 = vunpack.c.l.b16 %v352
        %v449 = vunpack.c.l.b16 %v353
        %v450 = vunpack.c.l.b16 %v354
        %v451 = vunpack.c.l.b16 %v355
        %v452 = vunpack.c.l.b16 %v356
        %v453 = vunpack.c.l.b16 %v357
        %v454 = vunpack.c.l.b16 %v358
        %v455 = vunpack.c.l.b16 %v359
        %v456 = vunpack.c.l.b16 %v360
        %v457 = vunpack.c.l.b16 %v361
        %v458 = vunpack.c.l.b16 %v362
        %v459 = vpack.c.b16 %v444, %v443
        %v460 = vpack.c.b16 %v446, %v445
        %v461 = vpack.c.b16 %v448, %v447
        %v462 = vpack.c.b16 %v450, %v449
        %v463 = vpack.c.b16 %v452, %v451
        %v464 = vpack.c.b16 %v454, %v453
        %v465 = vpack.c.b16 %v456, %v455
        %v466 = vpack.c.b16 %v458, %v457
        %475 = vmatpush.bf16.msra.mxu0 %v466
        %476 = vmatpush.bf16.msra.mxu0 %v465
        %477 = vmatpush.bf16.msra.mxu0 %v464
        %478 = vmatpush.bf16.msra.mxu0 %v463
        %479 = vmatpush.bf16.msra.mxu0 %v462
        %480 = vmatpush.bf16.msra.mxu0 %v461
        %481 = vmatpush.bf16.msra.mxu0 %v460
        %482 = vmatpush.bf16.msra.mxu0 %v459
        %483 = vmatmul.bf16.gmra.mxu0 %v411
        %v484 = vpop.f32.mrf.mxu0
        %v485 = vadd.f32 0.0, %v484
        %v486 = vpop.f32.mrf.mxu0
        %v487 = vadd.f32 0.0, %v486
        %488 = vmatmul.bf16.gmra.mxu0 %v412
        %v489 = vpop.f32.mrf.mxu0
        %v490 = vadd.f32 0.0, %v489
        %v491 = vpop.f32.mrf.mxu0
        %v492 = vadd.f32 0.0, %v491
        %493 = vmatmul.bf16.gmra.mxu0 %v413
        %v494 = vpop.f32.mrf.mxu0
        %v495 = vadd.f32 0.0, %v494
        %v496 = vpop.f32.mrf.mxu0
        %v497 = vadd.f32 0.0, %v496
        %498 = vmatmul.bf16.gmra.mxu0 %v414
        %v499 = vpop.f32.mrf.mxu0
        %v500 = vadd.f32 0.0, %v499
        %v501 = vpop.f32.mrf.mxu0
        %v502 = vadd.f32 0.0, %v501
        %503 = vmatmul.bf16.gmra.mxu0 %v415
        %v504 = vpop.f32.mrf.mxu0
        %v505 = vadd.f32 0.0, %v504
        %v506 = vpop.f32.mrf.mxu0
        %v507 = vadd.f32 0.0, %v506
        %508 = vmatmul.bf16.gmra.mxu0 %v416
        %v509 = vpop.f32.mrf.mxu0
        %v510 = vadd.f32 0.0, %v509
        %v511 = vpop.f32.mrf.mxu0
        %v512 = vadd.f32 0.0, %v511
        %513 = vmatmul.bf16.gmra.mxu0 %v417
        %v514 = vpop.f32.mrf.mxu0
        %v515 = vadd.f32 0.0, %v514
        %v516 = vpop.f32.mrf.mxu0
        %v517 = vadd.f32 0.0, %v516
        %518 = vmatmul.bf16.gmra.mxu0 %v418
        %v519 = vpop.f32.mrf.mxu0
        %v520 = vadd.f32 0.0, %v519
        %v521 = vpop.f32.mrf.mxu0
        %v522 = vadd.f32 0.0, %v521
        %523 = vdwg.mxu0
        %v524 = vadd.f32 %v363, %v485
        %v525 = vadd.f32 %v364, %v487
        %v526 = vadd.f32 %v365, %v490
        %v527 = vadd.f32 %v366, %v492
        %v528 = vadd.f32 %v367, %v495
        %v529 = vadd.f32 %v368, %v497
        %v530 = vadd.f32 %v369, %v500
        %v531 = vadd.f32 %v370, %v502
        %v532 = vadd.f32 %v371, %v505
        %v533 = vadd.f32 %v372, %v507
        %v534 = vadd.f32 %v373, %v510
        %v535 = vadd.f32 %v374, %v512
        %v536 = vadd.f32 %v375, %v515
        %v537 = vadd.f32 %v376, %v517
        %v538 = vadd.f32 %v377, %v520
        %v539 = vadd.f32 %v378, %v522
        %540 = vst [vmem:[#allocation2] sm:$0xff] %v524
        %541 = vst [vmem:[#allocation2 + $0x8] sm:$0xff] %v525
        %542 = vst [vmem:[#allocation2 + $0x10] sm:$0xff] %v526
        %543 = vst [vmem:[#allocation2 + $0x18] sm:$0xff] %v527
        %544 = vst [vmem:[#allocation2 + $0x20] sm:$0xff] %v528
        %545 = vst [vmem:[#allocation2 + $0x28] sm:$0xff] %v529
        %546 = vst [vmem:[#allocation2 + $0x30] sm:$0xff] %v530
        %547 = vst [vmem:[#allocation2 + $0x38] sm:$0xff] %v531
        %548 = vst [vmem:[#allocation2 + $0x40] sm:$0xff] %v532
        %549 = vst [vmem:[#allocation2 + $0x48] sm:$0xff] %v533
        %550 = vst [vmem:[#allocation2 + $0x50] sm:$0xff] %v534
        %551 = vst [vmem:[#allocation2 + $0x58] sm:$0xff] %v535
        %552 = vst [vmem:[#allocation2 + $0x60] sm:$0xff] %v536
        %553 = vst [vmem:[#allocation2 + $0x68] sm:$0xff] %v537
        %554 = vst [vmem:[#allocation2 + $0x70] sm:$0xff] %v538
        %555 = vst [vmem:[#allocation2 + $0x78] sm:$0xff] %v539
        // Predicated region
        $region53: #{tpu_custom_call.1} parent=35 // pred_check
          %p556 = pneg %p306
        $region54: #{tpu_custom_call.1} parent=35 // pred_check_branch
          %558 = sbr.rel (%p556) target = $region56
        $region55: #{tpu_custom_call.1} parent=35 // pred_region
          %v559 = vld [vmem:[#allocation2] sm:$0xff]
          %v560 = vld [vmem:[#allocation2 + $0x8] sm:$0xff]
          %v561 = vld [vmem:[#allocation2 + $0x10] sm:$0xff]
          %v562 = vld [vmem:[#allocation2 + $0x18] sm:$0xff]
          %v563 = vld [vmem:[#allocation2 + $0x20] sm:$0xff]
          %v564 = vld [vmem:[#allocation2 + $0x28] sm:$0xff]
          %v565 = vld [vmem:[#allocation2 + $0x30] sm:$0xff]
          %v566 = vld [vmem:[#allocation2 + $0x38] sm:$0xff]
          %v567 = vld [vmem:[#allocation2 + $0x40] sm:$0xff]
          %v568 = vld [vmem:[#allocation2 + $0x48] sm:$0xff]
          %v569 = vld [vmem:[#allocation2 + $0x50] sm:$0xff]
          %v570 = vld [vmem:[#allocation2 + $0x58] sm:$0xff]
          %v571 = vld [vmem:[#allocation2 + $0x60] sm:$0xff]
          %v572 = vld [vmem:[#allocation2 + $0x68] sm:$0xff]
          %v573 = vld [vmem:[#allocation2 + $0x70] sm:$0xff]
          %v574 = vld [vmem:[#allocation2 + $0x78] sm:$0xff]
          %v575 = vpack.c.bf16 %v560, %v559
          %v576 = vpack.c.bf16 %v562, %v561
          %v577 = vpack.c.bf16 %v564, %v563
          %v578 = vpack.c.bf16 %v566, %v565
          %v579 = vpack.c.bf16 %v568, %v567
          %v580 = vpack.c.bf16 %v570, %v569
          %v581 = vpack.c.bf16 %v572, %v571
          %v582 = vpack.c.bf16 %v574, %v573
          %v583 = vld [vmem:[#allocation8] sm:$0xf]
          %v584 = vld [vmem:[#allocation8 + $0x4] sm:$0xf]
          %v585 = vld [vmem:[#allocation8 + $0x8] sm:$0xf]
          %v586 = vld [vmem:[#allocation8 + $0xc] sm:$0xf]
          %v587 = vld [vmem:[#allocation8 + $0x10] sm:$0xf]
          %v588 = vld [vmem:[#allocation8 + $0x14] sm:$0xf]
          %v589 = vld [vmem:[#allocation8 + $0x18] sm:$0xf]
          %v590 = vld [vmem:[#allocation8 + $0x1c] sm:$0xf]
          %v591 = vld [vmem:[#allocation8 + $0x20] sm:$0xf]
          %v592 = vld [vmem:[#allocation8 + $0x24] sm:$0xf]
          %v593 = vld [vmem:[#allocation8 + $0x28] sm:$0xf]
          %v594 = vld [vmem:[#allocation8 + $0x2c] sm:$0xf]
          %v595 = vld [vmem:[#allocation8 + $0x30] sm:$0xf]
          %v596 = vld [vmem:[#allocation8 + $0x34] sm:$0xf]
          %v597 = vld [vmem:[#allocation8 + $0x38] sm:$0xf]
          %v598 = vld [vmem:[#allocation8 + $0x3c] sm:$0xf]
          %v599 = vld [vmem:[%s3] sm:$0x1]
          %v601 = vperm.slane %v599, 0
          %v619 = vunpack.c.l.b16 %v583
          %v620 = vunpack.c.l.b16 %v584
          %v621 = vunpack.c.l.b16 %v585
          %v622 = vunpack.c.l.b16 %v586
          %v623 = vunpack.c.l.b16 %v587
          %v624 = vunpack.c.l.b16 %v588
          %v625 = vunpack.c.l.b16 %v589
          %v626 = vunpack.c.l.b16 %v590
          %v627 = vunpack.c.l.b16 %v591
          %v628 = vunpack.c.l.b16 %v592
          %v629 = vunpack.c.l.b16 %v593
          %v630 = vunpack.c.l.b16 %v594
          %v631 = vunpack.c.l.b16 %v595
          %v632 = vunpack.c.l.b16 %v596
          %v633 = vunpack.c.l.b16 %v597
          %v634 = vunpack.c.l.b16 %v598
          %v635 = vpack.c.b16 %v620, %v619
          %v636 = vpack.c.b16 %v622, %v621
          %v637 = vpack.c.b16 %v624, %v623
          %v638 = vpack.c.b16 %v626, %v625
          %v639 = vpack.c.b16 %v628, %v627
          %v640 = vpack.c.b16 %v630, %v629
          %v641 = vpack.c.b16 %v632, %v631
          %v642 = vpack.c.b16 %v634, %v633
          %651 = vmatpush.bf16.msra.mxu0 %v642
          %652 = vmatpush.bf16.msra.mxu0 %v641
          %653 = vmatpush.bf16.msra.mxu0 %v640
          %654 = vmatpush.bf16.msra.mxu0 %v639
          %655 = vmatpush.bf16.msra.mxu0 %v638
          %656 = vmatpush.bf16.msra.mxu0 %v637
          %657 = vmatpush.bf16.msra.mxu0 %v636
          %658 = vmatpush.bf16.msra.mxu0 %v635
          %659 = vmatmul.bf16.gmra.mxu0 %v575
          %v660 = vpop.f32.mrf.mxu0
          %v661 = vadd.f32 %v601, %v660
          %v662 = vpop.f32.mrf.mxu0
          %v663 = vadd.f32 %v601, %v662
          %664 = vmatmul.bf16.gmra.mxu0 %v576
          %v665 = vpop.f32.mrf.mxu0
          %v666 = vadd.f32 %v601, %v665
          %v667 = vpop.f32.mrf.mxu0
          %v668 = vadd.f32 %v601, %v667
          %669 = vmatmul.bf16.gmra.mxu0 %v577
          %v670 = vpop.f32.mrf.mxu0
          %v671 = vadd.f32 %v601, %v670
          %v672 = vpop.f32.mrf.mxu0
          %v673 = vadd.f32 %v601, %v672
          %674 = vmatmul.bf16.gmra.mxu0 %v578
          %v675 = vpop.f32.mrf.mxu0
          %v676 = vadd.f32 %v601, %v675
          %v677 = vpop.f32.mrf.mxu0
          %v678 = vadd.f32 %v601, %v677
          %679 = vmatmul.bf16.gmra.mxu0 %v579
          %v680 = vpop.f32.mrf.mxu0
          %v681 = vadd.f32 %v601, %v680
          %v682 = vpop.f32.mrf.mxu0
          %v683 = vadd.f32 %v601, %v682
          %684 = vmatmul.bf16.gmra.mxu0 %v580
          %v685 = vpop.f32.mrf.mxu0
          %v686 = vadd.f32 %v601, %v685
          %v687 = vpop.f32.mrf.mxu0
          %v688 = vadd.f32 %v601, %v687
          %689 = vmatmul.bf16.gmra.mxu0 %v581
          %v690 = vpop.f32.mrf.mxu0
          %v691 = vadd.f32 %v601, %v690
          %v692 = vpop.f32.mrf.mxu0
          %v693 = vadd.f32 %v601, %v692
          %694 = vmatmul.bf16.gmra.mxu0 %v582
          %v695 = vpop.f32.mrf.mxu0
          %v696 = vadd.f32 %v601, %v695
          %v697 = vpop.f32.mrf.mxu0
          %v698 = vadd.f32 %v601, %v697
          %699 = vdwg.mxu0
          %v700 = vmax.f32 %v661, 0.0
          %v701 = vmax.f32 %v663, 0.0
          %v702 = vmax.f32 %v666, 0.0
          %v703 = vmax.f32 %v668, 0.0
          %v704 = vmax.f32 %v671, 0.0
          %v705 = vmax.f32 %v673, 0.0
          %v706 = vmax.f32 %v676, 0.0
          %v707 = vmax.f32 %v678, 0.0
          %v708 = vmax.f32 %v681, 0.0
          %v709 = vmax.f32 %v683, 0.0
          %v710 = vmax.f32 %v686, 0.0
          %v711 = vmax.f32 %v688, 0.0
          %v712 = vmax.f32 %v691, 0.0
          %v713 = vmax.f32 %v693, 0.0
          %v714 = vmax.f32 %v696, 0.0
          %v715 = vmax.f32 %v698, 0.0
          %716 = vst [vmem:[%s303] sm:$0xff] %v700
          %717 = vst [vmem:[%s303 + $0x8] sm:$0xff] %v701
          %718 = vst [vmem:[%s303 + $0x10] sm:$0xff] %v702
          %719 = vst [vmem:[%s303 + $0x18] sm:$0xff] %v703
          %720 = vst [vmem:[%s303 + $0x20] sm:$0xff] %v704
          %721 = vst [vmem:[%s303 + $0x28] sm:$0xff] %v705
          %722 = vst [vmem:[%s303 + $0x30] sm:$0xff] %v706
          %723 = vst [vmem:[%s303 + $0x38] sm:$0xff] %v707
          %724 = vst [vmem:[%s303 + $0x40] sm:$0xff] %v708
          %725 = vst [vmem:[%s303 + $0x48] sm:$0xff] %v709
          %726 = vst [vmem:[%s303 + $0x50] sm:$0xff] %v710
          %727 = vst [vmem:[%s303 + $0x58] sm:$0xff] %v711
          %728 = vst [vmem:[%s303 + $0x60] sm:$0xff] %v712
          %729 = vst [vmem:[%s303 + $0x68] sm:$0xff] %v713
          %730 = vst [vmem:[%s303 + $0x70] sm:$0xff] %v714
          %731 = vst [vmem:[%s303 + $0x78] sm:$0xff] %v715
        $region56: #{tpu_custom_call.1} parent=35 // pred_fallthru
          _
        %s732 = sand.u32 %s151, 1
        %s733 = scalar_lea.sflag [#allocation5], %s732
        %s734 = sand.u32 %s151, 1
        %s735 = smul.addr %s734, 128
        %s736 = scalar_lea.vmem [#allocation9], %s735
        // Predicated region
        $region57: #{tpu_custom_call.1} parent=35 // pred_check
          %p737 = pneg %p161
        $region58: #{tpu_custom_call.1} parent=35 // pred_check_branch
          %739 = sbr.rel (%p737) target = $region60
        $region59: #{tpu_custom_call.1} parent=35 // pred_region
          %s740 = smul.u32 16, %s30
          %742 = vsyncadd %s733, 0
          %s743 = smul.addr %s29, 16
          %s744 = sadd.s32 %s740, %s743
          %s745 = smul.addr %s744, 8
          %s746 = scalar_lea.hbm %s4, %s745
          %s747 = sshll.u32 %s736, 4
          %s748 = int_to_ptr.vmem [resolvable:$true] %s747
          %s749 = sshll.u32 %s746, 4
          %s750 = int_to_ptr.hbm [resolvable:$true] %s749
          %755 = dma.vmem_to_hbm [thread:$0]  %s748, 2048, %s750, %s733, 128, 128, 8
        $region60: #{tpu_custom_call.1} parent=35 // pred_fallthru
          _
      $region36: #{tpu_custom_call.1} parent=5 // pred_fallthru
        _
      %p756 = scmp.le.s32.totalorder 2, %s19
      // Predicated region
      $region61: #{tpu_custom_call.1} parent=5 // pred_check
        %p757 = pneg %p756
      $region62: #{tpu_custom_call.1} parent=5 // pred_check_branch
        %759 = sbr.rel (%p757) target = $region64
      $region63: #{tpu_custom_call.1} parent=5 // pred_region
        %s760 = ssub.s32 %s19, 2
        // Predicated region
        $region65: #{tpu_custom_call.1} parent=63 // pred_check
          %p761 = pneg %p167
        $region66: #{tpu_custom_call.1} parent=63 // pred_check_branch
          %763 = sbr.rel (%p761) target = $region68
        $region67: #{tpu_custom_call.1} parent=63 // pred_region
          %s764 = sand.u32 %s152, 1
          %s765 = scalar_lea.sflag [#allocation5], %s764
          %s766 = sand.u32 %s152, 1
          %s767 = smul.addr %s766, 128
          %s768 = scalar_lea.vmem [#allocation9], %s767
          %770 = dma.done %s765, 2048
        $region68: #{tpu_custom_call.1} parent=63 // pred_fallthru
          _
      $region64: #{tpu_custom_call.1} parent=5 // pred_fallthru
        _
    $region6: #{tpu_custom_call.1} parent=1 // loop_footer
      %s23 = sadd.s32 1, %s19
    $region7: #{tpu_custom_call.1} parent=1 // loop_footer_branch
      %18 = sbr.rel target = $region3
    $region8: #{tpu_custom_call.1} parent=1 // loop_exit
      _
    %771 = vsyncpa [#allocation4], 1
    %s772 = scalar_lea.sflag [#allocation4], 1
    %773 = vsyncpa %s772, 1
    %774 = vsyncpa [#allocation7], 1
    %s775 = scalar_lea.sflag [#allocation7], 1
    %776 = vsyncpa %s775, 1
    %777 = vsyncpa [#allocation5], 1
    %s778 = scalar_lea.sflag [#allocation5], 1
    %779 = vsyncpa %s778, 1

</llo_original>
